<compile_context>
chip_gen: v7x
topology: tpu7x:2x2x1
jax: 0.10.0
libtpu: 0.0.40
codegen_flags: <defaults>
</compile_context>

<pallas_src>
import functools

import jax
import jax.numpy as jnp
from jax.experimental import pallas as pl
from jax.experimental.pallas import tpu as pltpu


def lstm_kernel(tok_ref, embf_ref, whh_ref, wfc_ref, bfc_ref, out_ref, *, T, B, H):
    """Single-invocation kernel: all operands VMEM-resident (total < 100 KB)."""
    V = embf_ref.shape[0]
    TB = T * B

    # --- Fused embedding + input-projection + bias as ONE one-hot matmul. ---
    # emb_fused[v] = emb[v] @ W_ih^T + (b_ih + b_hh); each one-hot row sums to
    # 1, so onehot @ emb_fused == emb[tok] @ W_ih^T + b  (bias folds correctly).
    tok = tok_ref[...]                                            # (T*B, 1) int32
    lane_ids = jax.lax.broadcasted_iota(jnp.int32, (TB, V), 1)    # (T*B, V)
    onehot = (lane_ids == tok).astype(jnp.float32)                # (T*B, V)
    gates_x = jnp.dot(onehot, embf_ref[...],
                      preferred_element_type=jnp.float32)         # (T*B, 4H)

    whh = whh_ref[...]                                            # (H, 4H)

    # --- Fully-unrolled recurrence; only h @ W_hh^T is on the serial path. ---
    h = jnp.zeros((B, H), jnp.float32)
    c = jnp.zeros((B, H), jnp.float32)
    for t in range(T):                       # T static & small -> full unroll
        gates = (gates_x[t * B:(t + 1) * B, :]                    # one f32 vreg
                 + jnp.dot(h, whh, preferred_element_type=jnp.float32))
        # Two full-vreg EUP passes instead of four quarter-vreg ones.
        sig = jax.nn.sigmoid(gates)                               # (B, 4H)
        tnh = jnp.tanh(gates)                                     # (B, 4H)
        i_g = sig[:, 0 * H:1 * H]
        f_g = sig[:, 1 * H:2 * H]
        g_g = tnh[:, 2 * H:3 * H]
        o_g = sig[:, 3 * H:4 * H]
        c = f_g * c + i_g * g_g
        h = o_g * jnp.tanh(c)

    # --- Final Linear; output width padded to 128 -> unmasked lane-dense store.
    out_ref[...] = (jnp.dot(h, wfc_ref[...], preferred_element_type=jnp.float32)
                    + bfc_ref[...])


def prepare_params(emb, w_ih, w_hh, b_ih, b_hh, w_fc, b_fc):
    """One-time (init-time) parameter preparation — NOT on the per-call path.

    Returns (emb_fused (V,4H), whh (H,4H), wfc_pad (H,OP), bfc_pad (1,OP))."""
    H = w_hh.shape[1]
    O = w_fc.shape[0]
    b = (b_ih + b_hh).reshape(1, -1).astype(jnp.float32)          # (1, 4H)
    emb_fused = (emb.astype(jnp.float32) @ w_ih.T.astype(jnp.float32)) + b
    whh = w_hh.T.astype(jnp.float32)                              # (H, 4H)
    OP = max(128, pl.cdiv(O, 128) * 128)
    wfc_pad = jnp.zeros((H, OP), jnp.float32).at[:, :O].set(w_fc.T)
    bfc_pad = jnp.zeros((1, OP), jnp.float32).at[:, :O].set(b_fc.reshape(1, -1))
    return emb_fused, whh, wfc_pad, bfc_pad


@jax.jit
def lstm_forward_padded(tokens, emb_fused, whh, wfc_pad, bfc_pad):
    """Hot path: tiny token reshape + one pallas_call. Returns (B, OP) padded
    logits; the caller slices to (B, O) off the hot path if needed."""
    B, T = tokens.shape
    H = whh.shape[0]
    OP = wfc_pad.shape[1]

    # Time-major token ids: row t*B + b corresponds to tokens[b, t].
    tok = tokens.astype(jnp.int32).T.reshape(T * B, 1)

    kernel = functools.partial(lstm_kernel, T=T, B=B, H=H)
    vmem = pl.BlockSpec(memory_space=pltpu.MemorySpace.VMEM)

    return pl.pallas_call(
        kernel,
        out_shape=jax.ShapeDtypeStruct((B, OP), jnp.float32),
        in_specs=[vmem] * 5,
        out_specs=vmem,
    )(tok, emb_fused, whh, wfc_pad, bfc_pad)


def lstm_reference(tokens, emb, w_ih, w_hh, b_ih, b_hh, w_fc, b_fc):
    """Pure-JAX reference matching the PyTorch module exactly."""
    embeds = jnp.take(emb, tokens, axis=0)            # (B, T, E)
    B, T, E = embeds.shape
    H = w_hh.shape[1]
    wih_t = w_ih.T
    whh_t = w_hh.T
    b = (b_ih + b_hh).reshape(1, -1)
    h = jnp.zeros((B, H), jnp.float32)
    c = jnp.zeros((B, H), jnp.float32)
    for t in range(T):
        gates = embeds[:, t] @ wih_t + h @ whh_t + b
        i_g = jax.nn.sigmoid(gates[:, 0 * H:1 * H])
        f_g = jax.nn.sigmoid(gates[:, 1 * H:2 * H])
        g_g = jnp.tanh(gates[:, 2 * H:3 * H])
        o_g = jax.nn.sigmoid(gates[:, 3 * H:4 * H])
        c = f_g * c + i_g * g_g
        h = o_g * jnp.tanh(c)
    return h @ w_fc.T + b_fc.reshape(1, -1)


if __name__ == "__main__":
    # Model hyperparameters (module __init__ args).
    vocab_size = 50
    embedding_dim = 16
    hidden_size = 32
    output_size = 10

    # Input shape (batch, seq).
    B, T = 8, 8

    key = jax.random.PRNGKey(0)
    k_tok, k_emb, k_wih, k_whh, k_bih, k_bhh, k_wfc, k_bfc = jax.random.split(key, 8)

    tokens = jax.random.randint(k_tok, (B, T), 0, vocab_size, dtype=jnp.int32)
    # Correctness note from review: one-hot gather silently zeroes out-of-range
    # ids (nn.Embedding would raise) — guard here with a host-side check.
    assert int(jnp.max(tokens)) < vocab_size and int(jnp.min(tokens)) >= 0

    # Deterministic parameter init (shapes match nn.Embedding / nn.LSTM / nn.Linear).
    emb = 0.1 * jax.random.normal(k_emb, (vocab_size, embedding_dim), jnp.float32)
    w_ih = 0.1 * jax.random.normal(k_wih, (4 * hidden_size, embedding_dim), jnp.float32)
    w_hh = 0.1 * jax.random.normal(k_whh, (4 * hidden_size, hidden_size), jnp.float32)
    b_ih = 0.1 * jax.random.normal(k_bih, (4 * hidden_size,), jnp.float32)
    b_hh = 0.1 * jax.random.normal(k_bhh, (4 * hidden_size,), jnp.float32)
    w_fc = 0.1 * jax.random.normal(k_wfc, (output_size, hidden_size), jnp.float32)
    b_fc = 0.1 * jax.random.normal(k_bfc, (output_size,), jnp.float32)

    # One-time parameter prep (pre-fused embedding, padded FC) — off hot path.
    emb_fused, whh, wfc_pad, bfc_pad = prepare_params(
        emb, w_ih, w_hh, b_ih, b_hh, w_fc, b_fc)
    emb_fused, whh, wfc_pad, bfc_pad = jax.block_until_ready(
        (emb_fused, whh, wfc_pad, bfc_pad))

    # Hot path: one jitted call -> padded logits.
    out_pad = lstm_forward_padded(tokens, emb_fused, whh, wfc_pad, bfc_pad)
    out_pad = jax.block_until_ready(out_pad)
    out = out_pad[:, :output_size]                    # off-hot-path slice

    ref = lstm_reference(tokens, emb, w_ih, w_hh, b_ih, b_hh, w_fc, b_fc)
    assert out.shape == (B, output_size)
    assert jnp.allclose(out, ref, rtol=1e-4, atol=1e-4), \
        f"max abs err {jnp.max(jnp.abs(out - ref))}"
    # Padding lanes must be exactly zero (zero-padded weights + zero bias).
    assert jnp.allclose(out_pad[:, output_size:], 0.0)

    print("KERNEL_OK")
</pallas_src>

<mosaic_0001>
module attributes {stable_mosaic.version = 11 : i64} {
  func.func @lstm_kernel(%arg0: memref<64x1xi32, #tpu.memory_space<vmem>>, %arg1: memref<50x128xf32, #tpu.memory_space<vmem>>, %arg2: memref<32x128xf32, #tpu.memory_space<vmem>>, %arg3: memref<32x128xf32, #tpu.memory_space<vmem>>, %arg4: memref<1x128xf32, #tpu.memory_space<vmem>>, %arg5: memref<8x128xf32, #tpu.memory_space<vmem>>) attributes {dimension_semantics = [], scalar_prefetch = 0 : i64, scratch_operands = 0 : i64, tpu.core_type = #tpu.core_type<tc>} {
    %c0 = arith.constant 0 : index
    %c0_0 = arith.constant 0 : index
    %0 = vector.load %arg0[%c0, %c0_0] : memref<64x1xi32, #tpu.memory_space<vmem>>, vector<64x1xi32>
    %1 = tpu.iota {dimensions = array<i32: 1>} : vector<64x50xi32>
    %2 = vector.broadcast %0 : vector<64x1xi32> to vector<64x50xi32>
    %3 = arith.cmpi eq, %1, %2 : vector<64x50xi32>
    %4 = arith.extui %3 : vector<64x50xi1> to vector<64x50xi32>
    %5 = arith.sitofp %4 : vector<64x50xi32> to vector<64x50xf32>
    %c0_1 = arith.constant 0 : index
    %c0_2 = arith.constant 0 : index
    %6 = vector.load %arg1[%c0_1, %c0_2] : memref<50x128xf32, #tpu.memory_space<vmem>>, vector<50x128xf32>
    %cst = arith.constant dense<0.000000e+00> : vector<64x128xf32>
    %7 = tpu.matmul %5, %6, %cst {dimension_numbers = #tpu.dot_dimension_numbers<[1], [0], [0], [1], [0, 0, 1, 1], [], []>} : vector<64x50xf32>, vector<50x128xf32>, vector<64x128xf32> -> vector<64x128xf32>
    %c0_3 = arith.constant 0 : index
    %c0_4 = arith.constant 0 : index
    %8 = vector.load %arg2[%c0_3, %c0_4] : memref<32x128xf32, #tpu.memory_space<vmem>>, vector<32x128xf32>
    %cst_5 = arith.constant 0.000000e+00 : f32
    %9 = vector.broadcast %cst_5 : f32 to vector<8x32xf32>
    %cst_6 = arith.constant 0.000000e+00 : f32
    %10 = vector.broadcast %cst_6 : f32 to vector<8x32xf32>
    %11 = vector.extract_strided_slice %7 {offsets = [0, 0], sizes = [8, 128], strides = [1, 1]} : vector<64x128xf32> to vector<8x128xf32>
    %cst_7 = arith.constant dense<0.000000e+00> : vector<8x128xf32>
    %12 = tpu.matmul %9, %8, %cst_7 {dimension_numbers = #tpu.dot_dimension_numbers<[1], [0], [0], [1], [0, 0, 1, 1], [], []>} : vector<8x32xf32>, vector<32x128xf32>, vector<8x128xf32> -> vector<8x128xf32>
    %13 = arith.addf %11, %12 : vector<8x128xf32>
    %14 = arith.negf %13 : vector<8x128xf32>
    %15 = math.exp %14 : vector<8x128xf32>
    %cst_8 = arith.constant 1.000000e+00 : f32
    %16 = vector.broadcast %cst_8 : f32 to vector<8x128xf32>
    %17 = arith.addf %16, %15 : vector<8x128xf32>
    %18 = arith.divf %16, %17 : vector<8x128xf32>
    %19 = math.tanh %13 : vector<8x128xf32>
    %20 = vector.extract_strided_slice %18 {offsets = [0, 0], sizes = [8, 32], strides = [1, 1]} : vector<8x128xf32> to vector<8x32xf32>
    %21 = vector.extract_strided_slice %18 {offsets = [0, 32], sizes = [8, 32], strides = [1, 1]} : vector<8x128xf32> to vector<8x32xf32>
    %22 = vector.extract_strided_slice %19 {offsets = [0, 64], sizes = [8, 32], strides = [1, 1]} : vector<8x128xf32> to vector<8x32xf32>
    %23 = vector.extract_strided_slice %18 {offsets = [0, 96], sizes = [8, 32], strides = [1, 1]} : vector<8x128xf32> to vector<8x32xf32>
    %24 = arith.mulf %21, %10 : vector<8x32xf32>
    %25 = arith.mulf %20, %22 : vector<8x32xf32>
    %26 = arith.addf %24, %25 : vector<8x32xf32>
    %27 = math.tanh %26 : vector<8x32xf32>
    %28 = arith.mulf %23, %27 : vector<8x32xf32>
    %29 = vector.extract_strided_slice %7 {offsets = [8, 0], sizes = [8, 128], strides = [1, 1]} : vector<64x128xf32> to vector<8x128xf32>
    %cst_9 = arith.constant dense<0.000000e+00> : vector<8x128xf32>
    %30 = tpu.matmul %28, %8, %cst_9 {dimension_numbers = #tpu.dot_dimension_numbers<[1], [0], [0], [1], [0, 0, 1, 1], [], []>} : vector<8x32xf32>, vector<32x128xf32>, vector<8x128xf32> -> vector<8x128xf32>
    %31 = arith.addf %29, %30 : vector<8x128xf32>
    %32 = arith.negf %31 : vector<8x128xf32>
    %33 = math.exp %32 : vector<8x128xf32>
    %cst_10 = arith.constant 1.000000e+00 : f32
    %34 = vector.broadcast %cst_10 : f32 to vector<8x128xf32>
    %35 = arith.addf %34, %33 : vector<8x128xf32>
    %36 = arith.divf %34, %35 : vector<8x128xf32>
    %37 = math.tanh %31 : vector<8x128xf32>
    %38 = vector.extract_strided_slice %36 {offsets = [0, 0], sizes = [8, 32], strides = [1, 1]} : vector<8x128xf32> to vector<8x32xf32>
    %39 = vector.extract_strided_slice %36 {offsets = [0, 32], sizes = [8, 32], strides = [1, 1]} : vector<8x128xf32> to vector<8x32xf32>
    %40 = vector.extract_strided_slice %37 {offsets = [0, 64], sizes = [8, 32], strides = [1, 1]} : vector<8x128xf32> to vector<8x32xf32>
    %41 = vector.extract_strided_slice %36 {offsets = [0, 96], sizes = [8, 32], strides = [1, 1]} : vector<8x128xf32> to vector<8x32xf32>
    %42 = arith.mulf %39, %26 : vector<8x32xf32>
    %43 = arith.mulf %38, %40 : vector<8x32xf32>
    %44 = arith.addf %42, %43 : vector<8x32xf32>
    %45 = math.tanh %44 : vector<8x32xf32>
    %46 = arith.mulf %41, %45 : vector<8x32xf32>
    %47 = vector.extract_strided_slice %7 {offsets = [16, 0], sizes = [8, 128], strides = [1, 1]} : vector<64x128xf32> to vector<8x128xf32>
    %cst_11 = arith.constant dense<0.000000e+00> : vector<8x128xf32>
    %48 = tpu.matmul %46, %8, %cst_11 {dimension_numbers = #tpu.dot_dimension_numbers<[1], [0], [0], [1], [0, 0, 1, 1], [], []>} : vector<8x32xf32>, vector<32x128xf32>, vector<8x128xf32> -> vector<8x128xf32>
    %49 = arith.addf %47, %48 : vector<8x128xf32>
    %50 = arith.negf %49 : vector<8x128xf32>
    %51 = math.exp %50 : vector<8x128xf32>
    %cst_12 = arith.constant 1.000000e+00 : f32
    %52 = vector.broadcast %cst_12 : f32 to vector<8x128xf32>
    %53 = arith.addf %52, %51 : vector<8x128xf32>
    %54 = arith.divf %52, %53 : vector<8x128xf32>
    %55 = math.tanh %49 : vector<8x128xf32>
    %56 = vector.extract_strided_slice %54 {offsets = [0, 0], sizes = [8, 32], strides = [1, 1]} : vector<8x128xf32> to vector<8x32xf32>
    %57 = vector.extract_strided_slice %54 {offsets = [0, 32], sizes = [8, 32], strides = [1, 1]} : vector<8x128xf32> to vector<8x32xf32>
    %58 = vector.extract_strided_slice %55 {offsets = [0, 64], sizes = [8, 32], strides = [1, 1]} : vector<8x128xf32> to vector<8x32xf32>
    %59 = vector.extract_strided_slice %54 {offsets = [0, 96], sizes = [8, 32], strides = [1, 1]} : vector<8x128xf32> to vector<8x32xf32>
    %60 = arith.mulf %57, %44 : vector<8x32xf32>
    %61 = arith.mulf %56, %58 : vector<8x32xf32>
    %62 = arith.addf %60, %61 : vector<8x32xf32>
    %63 = math.tanh %62 : vector<8x32xf32>
    %64 = arith.mulf %59, %63 : vector<8x32xf32>
    %65 = vector.extract_strided_slice %7 {offsets = [24, 0], sizes = [8, 128], strides = [1, 1]} : vector<64x128xf32> to vector<8x128xf32>
    %cst_13 = arith.constant dense<0.000000e+00> : vector<8x128xf32>
    %66 = tpu.matmul %64, %8, %cst_13 {dimension_numbers = #tpu.dot_dimension_numbers<[1], [0], [0], [1], [0, 0, 1, 1], [], []>} : vector<8x32xf32>, vector<32x128xf32>, vector<8x128xf32> -> vector<8x128xf32>
    %67 = arith.addf %65, %66 : vector<8x128xf32>
    %68 = arith.negf %67 : vector<8x128xf32>
    %69 = math.exp %68 : vector<8x128xf32>
    %cst_14 = arith.constant 1.000000e+00 : f32
    %70 = vector.broadcast %cst_14 : f32 to vector<8x128xf32>
    %71 = arith.addf %70, %69 : vector<8x128xf32>
    %72 = arith.divf %70, %71 : vector<8x128xf32>
    %73 = math.tanh %67 : vector<8x128xf32>
    %74 = vector.extract_strided_slice %72 {offsets = [0, 0], sizes = [8, 32], strides = [1, 1]} : vector<8x128xf32> to vector<8x32xf32>
    %75 = vector.extract_strided_slice %72 {offsets = [0, 32], sizes = [8, 32], strides = [1, 1]} : vector<8x128xf32> to vector<8x32xf32>
    %76 = vector.extract_strided_slice %73 {offsets = [0, 64], sizes = [8, 32], strides = [1, 1]} : vector<8x128xf32> to vector<8x32xf32>
    %77 = vector.extract_strided_slice %72 {offsets = [0, 96], sizes = [8, 32], strides = [1, 1]} : vector<8x128xf32> to vector<8x32xf32>
    %78 = arith.mulf %75, %62 : vector<8x32xf32>
    %79 = arith.mulf %74, %76 : vector<8x32xf32>
    %80 = arith.addf %78, %79 : vector<8x32xf32>
    %81 = math.tanh %80 : vector<8x32xf32>
    %82 = arith.mulf %77, %81 : vector<8x32xf32>
    %83 = vector.extract_strided_slice %7 {offsets = [32, 0], sizes = [8, 128], strides = [1, 1]} : vector<64x128xf32> to vector<8x128xf32>
    %cst_15 = arith.constant dense<0.000000e+00> : vector<8x128xf32>
    %84 = tpu.matmul %82, %8, %cst_15 {dimension_numbers = #tpu.dot_dimension_numbers<[1], [0], [0], [1], [0, 0, 1, 1], [], []>} : vector<8x32xf32>, vector<32x128xf32>, vector<8x128xf32> -> vector<8x128xf32>
    %85 = arith.addf %83, %84 : vector<8x128xf32>
    %86 = arith.negf %85 : vector<8x128xf32>
    %87 = math.exp %86 : vector<8x128xf32>
    %cst_16 = arith.constant 1.000000e+00 : f32
    %88 = vector.broadcast %cst_16 : f32 to vector<8x128xf32>
    %89 = arith.addf %88, %87 : vector<8x128xf32>
    %90 = arith.divf %88, %89 : vector<8x128xf32>
    %91 = math.tanh %85 : vector<8x128xf32>
    %92 = vector.extract_strided_slice %90 {offsets = [0, 0], sizes = [8, 32], strides = [1, 1]} : vector<8x128xf32> to vector<8x32xf32>
    %93 = vector.extract_strided_slice %90 {offsets = [0, 32], sizes = [8, 32], strides = [1, 1]} : vector<8x128xf32> to vector<8x32xf32>
    %94 = vector.extract_strided_slice %91 {offsets = [0, 64], sizes = [8, 32], strides = [1, 1]} : vector<8x128xf32> to vector<8x32xf32>
    %95 = vector.extract_strided_slice %90 {offsets = [0, 96], sizes = [8, 32], strides = [1, 1]} : vector<8x128xf32> to vector<8x32xf32>
    %96 = arith.mulf %93, %80 : vector<8x32xf32>
    %97 = arith.mulf %92, %94 : vector<8x32xf32>
    %98 = arith.addf %96, %97 : vector<8x32xf32>
    %99 = math.tanh %98 : vector<8x32xf32>
    %100 = arith.mulf %95, %99 : vector<8x32xf32>
    %101 = vector.extract_strided_slice %7 {offsets = [40, 0], sizes = [8, 128], strides = [1, 1]} : vector<64x128xf32> to vector<8x128xf32>
    %cst_17 = arith.constant dense<0.000000e+00> : vector<8x128xf32>
    %102 = tpu.matmul %100, %8, %cst_17 {dimension_numbers = #tpu.dot_dimension_numbers<[1], [0], [0], [1], [0, 0, 1, 1], [], []>} : vector<8x32xf32>, vector<32x128xf32>, vector<8x128xf32> -> vector<8x128xf32>
    %103 = arith.addf %101, %102 : vector<8x128xf32>
    %104 = arith.negf %103 : vector<8x128xf32>
    %105 = math.exp %104 : vector<8x128xf32>
    %cst_18 = arith.constant 1.000000e+00 : f32
    %106 = vector.broadcast %cst_18 : f32 to vector<8x128xf32>
    %107 = arith.addf %106, %105 : vector<8x128xf32>
    %108 = arith.divf %106, %107 : vector<8x128xf32>
    %109 = math.tanh %103 : vector<8x128xf32>
    %110 = vector.extract_strided_slice %108 {offsets = [0, 0], sizes = [8, 32], strides = [1, 1]} : vector<8x128xf32> to vector<8x32xf32>
    %111 = vector.extract_strided_slice %108 {offsets = [0, 32], sizes = [8, 32], strides = [1, 1]} : vector<8x128xf32> to vector<8x32xf32>
    %112 = vector.extract_strided_slice %109 {offsets = [0, 64], sizes = [8, 32], strides = [1, 1]} : vector<8x128xf32> to vector<8x32xf32>
    %113 = vector.extract_strided_slice %108 {offsets = [0, 96], sizes = [8, 32], strides = [1, 1]} : vector<8x128xf32> to vector<8x32xf32>
    %114 = arith.mulf %111, %98 : vector<8x32xf32>
    %115 = arith.mulf %110, %112 : vector<8x32xf32>
    %116 = arith.addf %114, %115 : vector<8x32xf32>
    %117 = math.tanh %116 : vector<8x32xf32>
    %118 = arith.mulf %113, %117 : vector<8x32xf32>
    %119 = vector.extract_strided_slice %7 {offsets = [48, 0], sizes = [8, 128], strides = [1, 1]} : vector<64x128xf32> to vector<8x128xf32>
    %cst_19 = arith.constant dense<0.000000e+00> : vector<8x128xf32>
    %120 = tpu.matmul %118, %8, %cst_19 {dimension_numbers = #tpu.dot_dimension_numbers<[1], [0], [0], [1], [0, 0, 1, 1], [], []>} : vector<8x32xf32>, vector<32x128xf32>, vector<8x128xf32> -> vector<8x128xf32>
    %121 = arith.addf %119, %120 : vector<8x128xf32>
    %122 = arith.negf %121 : vector<8x128xf32>
    %123 = math.exp %122 : vector<8x128xf32>
    %cst_20 = arith.constant 1.000000e+00 : f32
    %124 = vector.broadcast %cst_20 : f32 to vector<8x128xf32>
    %125 = arith.addf %124, %123 : vector<8x128xf32>
    %126 = arith.divf %124, %125 : vector<8x128xf32>
    %127 = math.tanh %121 : vector<8x128xf32>
    %128 = vector.extract_strided_slice %126 {offsets = [0, 0], sizes = [8, 32], strides = [1, 1]} : vector<8x128xf32> to vector<8x32xf32>
    %129 = vector.extract_strided_slice %126 {offsets = [0, 32], sizes = [8, 32], strides = [1, 1]} : vector<8x128xf32> to vector<8x32xf32>
    %130 = vector.extract_strided_slice %127 {offsets = [0, 64], sizes = [8, 32], strides = [1, 1]} : vector<8x128xf32> to vector<8x32xf32>
    %131 = vector.extract_strided_slice %126 {offsets = [0, 96], sizes = [8, 32], strides = [1, 1]} : vector<8x128xf32> to vector<8x32xf32>
    %132 = arith.mulf %129, %116 : vector<8x32xf32>
    %133 = arith.mulf %128, %130 : vector<8x32xf32>
    %134 = arith.addf %132, %133 : vector<8x32xf32>
    %135 = math.tanh %134 : vector<8x32xf32>
    %136 = arith.mulf %131, %135 : vector<8x32xf32>
    %137 = vector.extract_strided_slice %7 {offsets = [56, 0], sizes = [8, 128], strides = [1, 1]} : vector<64x128xf32> to vector<8x128xf32>
    %cst_21 = arith.constant dense<0.000000e+00> : vector<8x128xf32>
    %138 = tpu.matmul %136, %8, %cst_21 {dimension_numbers = #tpu.dot_dimension_numbers<[1], [0], [0], [1], [0, 0, 1, 1], [], []>} : vector<8x32xf32>, vector<32x128xf32>, vector<8x128xf32> -> vector<8x128xf32>
    %139 = arith.addf %137, %138 : vector<8x128xf32>
    %140 = arith.negf %139 : vector<8x128xf32>
    %141 = math.exp %140 : vector<8x128xf32>
    %cst_22 = arith.constant 1.000000e+00 : f32
    %142 = vector.broadcast %cst_22 : f32 to vector<8x128xf32>
    %143 = arith.addf %142, %141 : vector<8x128xf32>
    %144 = arith.divf %142, %143 : vector<8x128xf32>
    %145 = math.tanh %139 : vector<8x128xf32>
    %146 = vector.extract_strided_slice %144 {offsets = [0, 0], sizes = [8, 32], strides = [1, 1]} : vector<8x128xf32> to vector<8x32xf32>
    %147 = vector.extract_strided_slice %144 {offsets = [0, 32], sizes = [8, 32], strides = [1, 1]} : vector<8x128xf32> to vector<8x32xf32>
    %148 = vector.extract_strided_slice %145 {offsets = [0, 64], sizes = [8, 32], strides = [1, 1]} : vector<8x128xf32> to vector<8x32xf32>
    %149 = vector.extract_strided_slice %144 {offsets = [0, 96], sizes = [8, 32], strides = [1, 1]} : vector<8x128xf32> to vector<8x32xf32>
    %150 = arith.mulf %147, %134 : vector<8x32xf32>
    %151 = arith.mulf %146, %148 : vector<8x32xf32>
    %152 = arith.addf %150, %151 : vector<8x32xf32>
    %153 = math.tanh %152 : vector<8x32xf32>
    %154 = arith.mulf %149, %153 : vector<8x32xf32>
    %c0_23 = arith.constant 0 : index
    %c0_24 = arith.constant 0 : index
    %155 = vector.load %arg3[%c0_23, %c0_24] : memref<32x128xf32, #tpu.memory_space<vmem>>, vector<32x128xf32>
    %cst_25 = arith.constant dense<0.000000e+00> : vector<8x128xf32>
    %156 = tpu.matmul %154, %155, %cst_25 {dimension_numbers = #tpu.dot_dimension_numbers<[1], [0], [0], [1], [0, 0, 1, 1], [], []>} : vector<8x32xf32>, vector<32x128xf32>, vector<8x128xf32> -> vector<8x128xf32>
    %c0_26 = arith.constant 0 : index
    %c0_27 = arith.constant 0 : index
    %157 = vector.load %arg4[%c0_26, %c0_27] : memref<1x128xf32, #tpu.memory_space<vmem>>, vector<1x128xf32>
    %158 = vector.broadcast %157 : vector<1x128xf32> to vector<8x128xf32>
    %159 = arith.addf %156, %158 : vector<8x128xf32>
    %c0_28 = arith.constant 0 : index
    %c0_29 = arith.constant 0 : index
    %160 = vector.load %arg5[%c0_28, %c0_29] : memref<8x128xf32, #tpu.memory_space<vmem>>, vector<8x128xf32>
    tpu.vector_store %arg5[%c0_28, %c0_29], %159 {strides = array<i32>} : memref<8x128xf32, #tpu.memory_space<vmem>>, vector<8x128xf32>,
    return
  }
}

</mosaic_0001>

<llo_original>
// kernel: lstm_forward_padded.1
$region0: #{lstm_forward_padded.1}
  #allocation0 [shape = 'u32[]', space=smem, size = 0x4, offset = 0x4, fixed_abs, tag = 'smem constant byte address 0x4 - core index']
  #allocation1 [shape = 'u32[144,128]{1,0:T(1,128)}', space=vmem, size = 0x12000, scoped, tag = 'internal scratch']
  %s0 = inlined_call_operand.vmem [shape: s32[64,1], index: 0, kind: input, shape index: {}]
  %s1 = inlined_call_operand.vmem [shape: f32[50,128], index: 1, kind: input, shape index: {}]
  %s2 = inlined_call_operand.vmem [shape: f32[32,128], index: 2, kind: input, shape index: {}]
  %s3 = inlined_call_operand.hbm [shape: f32[32,128], index: 3, kind: input, shape index: {}]
  %s4 = inlined_call_operand.vmem [shape: f32[1,128], index: 4, kind: input, shape index: {}]
  %s5 = inlined_call_operand.hbm [shape: f32[8,128], index: 5, kind: output, shape index: {}]
  %s6 = sld [smem:[#allocation0]]
  $region34: #{lstm_forward_padded.1} parent=0
    _
  %s8 = ssub.s32 1, %s6
  %s9 = scalar_select 0, %s8, %s6
  $region1: #{lstm_forward_padded.1} parent=0
    #allocation2 [shape = 'u8[16384]{0}', space=vmem, size = 0x4000, scoped, tag = 'input window, operand 3, single buffered']
    #allocation3 [shape = 's32[1]{0}', space=sflag, size = 0x4, scoped, tag = 'scoped memory for lstm_forward_padded.1']
    #allocation4 [shape = 's32[1]{0}', space=sflag, size = 0x4, scoped, tag = 'scoped memory for lstm_forward_padded.1']
    #allocation5 [shape = 'u8[4096]{0}', space=vmem, size = 0x1000, scoped, tag = 'output window, operand 0, single buffered']
    %10 = vsyncpa [#allocation3], 0
    %11 = vsyncpa [#allocation4], 0
    // Predicated region
    $region2: #{lstm_forward_padded.1} parent=1 // pred_check
      _
    $region3: #{lstm_forward_padded.1} parent=1 // pred_check_branch
      %13 = sbr.rel (0) target = $region5
    $region4: #{lstm_forward_padded.1} parent=1 // pred_region
      _
    $region5: #{lstm_forward_padded.1} parent=1 // pred_fallthru
      _
    // Predicated region
    $region6: #{lstm_forward_padded.1} parent=1 // pred_check
      _
    $region7: #{lstm_forward_padded.1} parent=1 // pred_check_branch
      %15 = sbr.rel (0) target = $region9
    $region8: #{lstm_forward_padded.1} parent=1 // pred_region
      _
    $region9: #{lstm_forward_padded.1} parent=1 // pred_fallthru
      _
    // Predicated region
    $region10: #{lstm_forward_padded.1} parent=1 // pred_check
      _
    $region11: #{lstm_forward_padded.1} parent=1 // pred_check_branch
      %17 = sbr.rel (0) target = $region13
    $region12: #{lstm_forward_padded.1} parent=1 // pred_region
      _
    $region13: #{lstm_forward_padded.1} parent=1 // pred_fallthru
      _
    // Predicated region
    $region14: #{lstm_forward_padded.1} parent=1 // pred_check
      _
    $region15: #{lstm_forward_padded.1} parent=1 // pred_check_branch
      %19 = sbr.rel (0) target = $region17
    $region16: #{lstm_forward_padded.1} parent=1 // pred_region
      %s21 = ssub.s32 512, 512
      %22 = vsyncadd [#allocation3], %s21
      %s23 = sshll.u32 [#allocation2], 4
      %s24 = int_to_ptr.vmem [resolvable:$true] %s23
      %29 = dma.hbm_to_vmem [thread:$0]  %s3, 512, %s24, [#allocation3], 128, 128, 8
    $region17: #{lstm_forward_padded.1} parent=1 // pred_fallthru
      _
    // Predicated region
    $region18: #{lstm_forward_padded.1} parent=1 // pred_check
      _
    $region19: #{lstm_forward_padded.1} parent=1 // pred_check_branch
      %31 = sbr.rel (0) target = $region21
    $region20: #{lstm_forward_padded.1} parent=1 // pred_region
      _
    $region21: #{lstm_forward_padded.1} parent=1 // pred_fallthru
      _
    // Predicated region
    $region22: #{lstm_forward_padded.1} parent=1 // pred_check
      _
    $region23: #{lstm_forward_padded.1} parent=1 // pred_check_branch
      %33 = sbr.rel (0) target = $region25
    $region24: #{lstm_forward_padded.1} parent=1 // pred_region
      %34 = dma.done [#allocation3], 512
    $region25: #{lstm_forward_padded.1} parent=1 // pred_fallthru
      _
    %v35 = vld [vmem:[%s0] sm:$0xff]
    %v36 = vld [vmem:[%s0 + $0x8] sm:$0xff]
    %v37 = vld [vmem:[%s0 + $0x10] sm:$0xff]
    %v38 = vld [vmem:[%s0 + $0x18] sm:$0xff]
    %v39 = vld [vmem:[%s0 + $0x20] sm:$0xff]
    %v40 = vld [vmem:[%s0 + $0x28] sm:$0xff]
    %v41 = vld [vmem:[%s0 + $0x30] sm:$0xff]
    %v42 = vld [vmem:[%s0 + $0x38] sm:$0xff]
    %v43 = vlaneseq
    %v44 = vand.u32 %v43, 127
    %45 = vset.pattern.permute.xlu0 0
    %46 = vperm.xlu0 %45, %v35
    %v47 = vpop.permute.xlu0 %46
    %48 = vset.pattern.permute.xlu0 0
    %49 = vperm.xlu0 %48, %v36
    %v50 = vpop.permute.xlu0 %49
    %51 = vset.pattern.permute.xlu0 0
    %52 = vperm.xlu0 %51, %v37
    %v53 = vpop.permute.xlu0 %52
    %54 = vset.pattern.permute.xlu0 0
    %55 = vperm.xlu0 %54, %v38
    %v56 = vpop.permute.xlu0 %55
    %57 = vset.pattern.permute.xlu0 0
    %58 = vperm.xlu0 %57, %v39
    %v59 = vpop.permute.xlu0 %58
    %60 = vset.pattern.permute.xlu0 0
    %61 = vperm.xlu0 %60, %v40
    %v62 = vpop.permute.xlu0 %61
    %63 = vset.pattern.permute.xlu0 0
    %64 = vperm.xlu0 %63, %v41
    %v65 = vpop.permute.xlu0 %64
    %66 = vset.pattern.permute.xlu0 0
    %67 = vperm.xlu0 %66, %v42
    %v68 = vpop.permute.xlu0 %67
    %vm69 = vcmp.eq.s32.totalorder %v44, %v47
    %vm70 = vcmp.eq.s32.totalorder %v44, %v50
    %vm71 = vcmp.eq.s32.totalorder %v44, %v53
    %vm72 = vcmp.eq.s32.totalorder %v44, %v56
    %vm73 = vcmp.eq.s32.totalorder %v44, %v59
    %vm74 = vcmp.eq.s32.totalorder %v44, %v62
    %vm75 = vcmp.eq.s32.totalorder %v44, %v65
    %vm76 = vcmp.eq.s32.totalorder %v44, %v68
    %v77 = vsel %vm69, 1, 0
    %v78 = vsel %vm70, 1, 0
    %v79 = vsel %vm71, 1, 0
    %v80 = vsel %vm72, 1, 0
    %v81 = vsel %vm73, 1, 0
    %v82 = vsel %vm74, 1, 0
    %v83 = vsel %vm75, 1, 0
    %v84 = vsel %vm76, 1, 0
    %v85 = vcvt.s32.f32 %v77
    %v86 = vcvt.s32.f32 %v78
    %v87 = vcvt.s32.f32 %v79
    %v88 = vcvt.s32.f32 %v80
    %v89 = vcvt.s32.f32 %v81
    %v90 = vcvt.s32.f32 %v82
    %v91 = vcvt.s32.f32 %v83
    %v92 = vcvt.s32.f32 %v84
    %v93 = vld [vmem:[%s1] sm:$0xff]
    %v94 = vld [vmem:[%s1 + $0x8] sm:$0xff]
    %v95 = vld [vmem:[%s1 + $0x10] sm:$0xff]
    %v96 = vld [vmem:[%s1 + $0x18] sm:$0xff]
    %v97 = vld [vmem:[%s1 + $0x20] sm:$0xff]
    %v98 = vld [vmem:[%s1 + $0x28] sm:$0xff]
    %v99 = vld [vmem:[%s1 + $0x30] sm:$0x3]
    %vm100 = vcmask 408576
    %v102 = vsel %vm100, %v85, 0
    %v105 = vsel %vm100, %v86, 0
    %v108 = vsel %vm100, %v87, 0
    %v111 = vsel %vm100, %v88, 0
    %v114 = vsel %vm100, %v89, 0
    %v117 = vsel %vm100, %v90, 0
    %v120 = vsel %vm100, %v91, 0
    %v123 = vsel %vm100, %v92, 0
    %vm125 = vcmask 1041408
    %v127 = vsel %vm125, %v99, 0
    %129 = vmatprep.subr.mxu0 0.0
    %130 = vmatpush1.msra.mxu0 %v93
    %131 = vmatprep.subr.mxu0 0.0
    %132 = vmatpush1.msra.mxu0 %v94
    %133 = vmatprep.subr.mxu0 0.0
    %134 = vmatpush1.msra.mxu0 %v95
    %135 = vmatprep.subr.mxu0 0.0
    %136 = vmatpush1.msra.mxu0 %v96
    %137 = vmatprep.subr.mxu0 0.0
    %138 = vmatpush1.msra.mxu0 %v97
    %139 = vmatprep.subr.mxu0 0.0
    %140 = vmatpush1.msra.mxu0 %v98
    %141 = vmatprep.subr.mxu0 0.0
    %142 = vmatpush1.msra.mxu0 %v127
    %143 = vmatprep.subr.mxu0 0.0
    %144 = vmatpush1.msra.mxu0 0.0
    %145 = vmatprep.subr.mxu0 0.0
    %146 = vmatpush1.msra.mxu0 0.0
    %147 = vmatprep.subr.mxu0 0.0
    %148 = vmatpush1.msra.mxu0 0.0
    %149 = vmatprep.subr.mxu0 0.0
    %150 = vmatpush1.msra.mxu0 0.0
    %151 = vmatprep.subr.mxu0 0.0
    %152 = vmatpush1.msra.mxu0 0.0
    %153 = vmatprep.subr.mxu0 0.0
    %154 = vmatpush1.msra.mxu0 0.0
    %155 = vmatprep.subr.mxu0 0.0
    %156 = vmatpush1.msra.mxu0 0.0
    %157 = vmatprep.subr.mxu0 0.0
    %158 = vmatpush1.msra.mxu0 0.0
    %159 = vmatprep.subr.mxu0 0.0
    %160 = vmatpush1.msra.mxu0 0.0
    %161 = vmatprep.subr.mxu0 0.0
    %162 = vmatpush1.msra.mxu0 0.0
    %163 = vmatprep.subr.mxu0 0.0
    %164 = vmatpush1.msra.mxu0 0.0
    %165 = vmatprep.subr.mxu0 0.0
    %166 = vmatpush1.msra.mxu0 0.0
    %167 = vmatprep.subr.mxu0 0.0
    %168 = vmatpush1.msra.mxu0 0.0
    %169 = vmatprep.subr.mxu0 0.0
    %170 = vmatpush1.msra.mxu0 0.0
    %171 = vmatprep.subr.mxu0 0.0
    %172 = vmatpush1.msra.mxu0 0.0
    %173 = vmatprep.subr.mxu0 0.0
    %174 = vmatpush1.msra.mxu0 0.0
    %175 = vmatprep.subr.mxu0 0.0
    %176 = vmatpush1.msra.mxu0 0.0
    %177 = vmatprep.subr.mxu0 0.0
    %178 = vmatpush1.msra.mxu0 0.0
    %179 = vmatprep.subr.mxu0 0.0
    %180 = vmatpush1.msra.mxu0 0.0
    %181 = vmatprep.subr.mxu0 0.0
    %182 = vmatpush1.msra.mxu0 0.0
    %183 = vmatprep.subr.mxu0 0.0
    %184 = vmatpush1.msra.mxu0 0.0
    %185 = vmatprep.subr.mxu0 0.0
    %186 = vmatpush1.msra.mxu0 0.0
    %187 = vmatprep.subr.mxu0 0.0
    %188 = vmatpush1.msra.mxu0 0.0
    %189 = vmatprep.subr.mxu0 0.0
    %190 = vmatpush1.msra.mxu0 0.0
    %191 = vmatprep.subr.mxu0 0.0
    %192 = vmatpush1.msra.mxu0 0.0
    %193 = vmatprep.mubr.f32.mxu0 0.0
    %194 = vmatmul.mubr.f32.gmra.mrb[0].mxu0 %v102
    %v195 = vpop.f32.mrb[0].mxu0
    %v196 = vadd.f32 0.0, %v195
    %v197 = vpop.f32.mrb[0].mxu0
    %198 = vmatprep.mubr.f32.mxu0 0.0
    %199 = vmatmul.mubr.f32.gmra.mrb[0].mxu0 %v105
    %v200 = vpop.f32.mrb[0].mxu0
    %v201 = vadd.f32 0.0, %v200
    %v202 = vpop.f32.mrb[0].mxu0
    %203 = vmatprep.mubr.f32.mxu0 0.0
    %204 = vmatmul.mubr.f32.gmra.mrb[0].mxu0 %v108
    %v205 = vpop.f32.mrb[0].mxu0
    %v206 = vadd.f32 0.0, %v205
    %v207 = vpop.f32.mrb[0].mxu0
    %208 = vmatprep.mubr.f32.mxu0 0.0
    %209 = vmatmul.mubr.f32.gmra.mrb[0].mxu0 %v111
    %v210 = vpop.f32.mrb[0].mxu0
    %v211 = vadd.f32 0.0, %v210
    %v212 = vpop.f32.mrb[0].mxu0
    %213 = vmatprep.mubr.f32.mxu0 0.0
    %214 = vmatmul.mubr.f32.gmra.mrb[0].mxu0 %v114
    %v215 = vpop.f32.mrb[0].mxu0
    %v216 = vadd.f32 0.0, %v215
    %v217 = vpop.f32.mrb[0].mxu0
    %218 = vmatprep.mubr.f32.mxu0 0.0
    %219 = vmatmul.mubr.f32.gmra.mrb[0].mxu0 %v117
    %v220 = vpop.f32.mrb[0].mxu0
    %v221 = vadd.f32 0.0, %v220
    %v222 = vpop.f32.mrb[0].mxu0
    %223 = vmatprep.mubr.f32.mxu0 0.0
    %224 = vmatmul.mubr.f32.gmra.mrb[0].mxu0 %v120
    %v225 = vpop.f32.mrb[0].mxu0
    %v226 = vadd.f32 0.0, %v225
    %v227 = vpop.f32.mrb[0].mxu0
    %228 = vmatprep.mubr.f32.mxu0 0.0
    %229 = vmatmul.mubr.f32.gmra.mrb[0].mxu0 %v123
    %v230 = vpop.f32.mrb[0].mxu0
    %v231 = vadd.f32 0.0, %v230
    %v232 = vpop.f32.mrb[0].mxu0
    %233 = vdwg.mxu0
    %v234 = vld [vmem:[%s2] sm:$0xff]
    %v235 = vld [vmem:[%s2 + $0x8] sm:$0xff]
    %v236 = vld [vmem:[%s2 + $0x10] sm:$0xff]
    %v237 = vld [vmem:[%s2 + $0x18] sm:$0xff]
    %vm238 = vcmask 261120
    %v240 = vsel %vm238, 0.0, 0
    %242 = vmatprep.subr.mxu0 0.0
    %243 = vmatpush1.msra.mxu0 %v234
    %244 = vmatprep.subr.mxu0 0.0
    %245 = vmatpush1.msra.mxu0 %v235
    %246 = vmatprep.subr.mxu0 0.0
    %247 = vmatpush1.msra.mxu0 %v236
    %248 = vmatprep.subr.mxu0 0.0
    %249 = vmatpush1.msra.mxu0 %v237
    %250 = vmatprep.subr.mxu0 0.0
    %251 = vmatpush1.msra.mxu0 0.0
    %252 = vmatprep.subr.mxu0 0.0
    %253 = vmatpush1.msra.mxu0 0.0
    %254 = vmatprep.subr.mxu0 0.0
    %255 = vmatpush1.msra.mxu0 0.0
    %256 = vmatprep.subr.mxu0 0.0
    %257 = vmatpush1.msra.mxu0 0.0
    %258 = vmatprep.subr.mxu0 0.0
    %259 = vmatpush1.msra.mxu0 0.0
    %260 = vmatprep.subr.mxu0 0.0
    %261 = vmatpush1.msra.mxu0 0.0
    %262 = vmatprep.subr.mxu0 0.0
    %263 = vmatpush1.msra.mxu0 0.0
    %264 = vmatprep.subr.mxu0 0.0
    %265 = vmatpush1.msra.mxu0 0.0
    %266 = vmatprep.subr.mxu0 0.0
    %267 = vmatpush1.msra.mxu0 0.0
    %268 = vmatprep.subr.mxu0 0.0
    %269 = vmatpush1.msra.mxu0 0.0
    %270 = vmatprep.subr.mxu0 0.0
    %271 = vmatpush1.msra.mxu0 0.0
    %272 = vmatprep.subr.mxu0 0.0
    %273 = vmatpush1.msra.mxu0 0.0
    %274 = vmatprep.subr.mxu0 0.0
    %275 = vmatpush1.msra.mxu0 0.0
    %276 = vmatprep.subr.mxu0 0.0
    %277 = vmatpush1.msra.mxu0 0.0
    %278 = vmatprep.subr.mxu0 0.0
    %279 = vmatpush1.msra.mxu0 0.0
    %280 = vmatprep.subr.mxu0 0.0
    %281 = vmatpush1.msra.mxu0 0.0
    %282 = vmatprep.subr.mxu0 0.0
    %283 = vmatpush1.msra.mxu0 0.0
    %284 = vmatprep.subr.mxu0 0.0
    %285 = vmatpush1.msra.mxu0 0.0
    %286 = vmatprep.subr.mxu0 0.0
    %287 = vmatpush1.msra.mxu0 0.0
    %288 = vmatprep.subr.mxu0 0.0
    %289 = vmatpush1.msra.mxu0 0.0
    %290 = vmatprep.subr.mxu0 0.0
    %291 = vmatpush1.msra.mxu0 0.0
    %292 = vmatprep.subr.mxu0 0.0
    %293 = vmatpush1.msra.mxu0 0.0
    %294 = vmatprep.subr.mxu0 0.0
    %295 = vmatpush1.msra.mxu0 0.0
    %296 = vmatprep.subr.mxu0 0.0
    %297 = vmatpush1.msra.mxu0 0.0
    %298 = vmatprep.subr.mxu0 0.0
    %299 = vmatpush1.msra.mxu0 0.0
    %300 = vmatprep.subr.mxu0 0.0
    %301 = vmatpush1.msra.mxu0 0.0
    %302 = vmatprep.subr.mxu0 0.0
    %303 = vmatpush1.msra.mxu0 0.0
    %304 = vmatprep.subr.mxu0 0.0
    %305 = vmatpush1.msra.mxu0 0.0
    %306 = vmatprep.mubr.f32.mxu0 0.0
    %307 = vmatmul.mubr.f32.gmra.mrb[0].mxu0 %v240
    %v308 = vpop.f32.mrb[0].mxu0
    %v309 = vadd.f32 0.0, %v308
    %v310 = vpop.f32.mrb[0].mxu0
    %311 = vdwg.mxu0
    %v312 = vadd.f32 %v196, %v309
    %v313 = vxor.u32 %v312, 2147483648
    %v314 = vmul.f32 %v313, 1.442695
    %v315 = vpow.pop %v314
    %v316 = vadd.f32 %v315, 1.0
    %v317 = vrcp.pop %v316
    %v318 = vmul.f32 1.0, %v317
    %v319 = vtanh.pop %v312
    %v320 = vmul.f32 %v318, 0.0
    %322 = vrot.lane.b32.xlu0 %v319, 64
    %v323 = vpop.permute.xlu0 %322
    %v325 = vmul.f32 %v318, %v323
    %327 = vrot.lane.b32.xlu0 %v325, 32
    %v328 = vpop.permute.xlu0 %327
    %v330 = vadd.f32 %v320, %v328
    %v331 = vtanh.pop %v330
    %333 = vrot.lane.b32.xlu0 %v331, 64
    %v334 = vpop.permute.xlu0 %333
    %v336 = vmul.f32 %v318, %v334
    %338 = vrot.lane.b32.xlu0 %v336, 32
    %v339 = vpop.permute.xlu0 %338
    %v340 = vsel %vm238, %v339, 0
    %342 = vmatprep.subr.mxu0 0.0
    %343 = vmatpush1.msra.mxu0 %v234
    %344 = vmatprep.subr.mxu0 0.0
    %345 = vmatpush1.msra.mxu0 %v235
    %346 = vmatprep.subr.mxu0 0.0
    %347 = vmatpush1.msra.mxu0 %v236
    %348 = vmatprep.subr.mxu0 0.0
    %349 = vmatpush1.msra.mxu0 %v237
    %350 = vmatprep.subr.mxu0 0.0
    %351 = vmatpush1.msra.mxu0 0.0
    %352 = vmatprep.subr.mxu0 0.0
    %353 = vmatpush1.msra.mxu0 0.0
    %354 = vmatprep.subr.mxu0 0.0
    %355 = vmatpush1.msra.mxu0 0.0
    %356 = vmatprep.subr.mxu0 0.0
    %357 = vmatpush1.msra.mxu0 0.0
    %358 = vmatprep.subr.mxu0 0.0
    %359 = vmatpush1.msra.mxu0 0.0
    %360 = vmatprep.subr.mxu0 0.0
    %361 = vmatpush1.msra.mxu0 0.0
    %362 = vmatprep.subr.mxu0 0.0
    %363 = vmatpush1.msra.mxu0 0.0
    %364 = vmatprep.subr.mxu0 0.0
    %365 = vmatpush1.msra.mxu0 0.0
    %366 = vmatprep.subr.mxu0 0.0
    %367 = vmatpush1.msra.mxu0 0.0
    %368 = vmatprep.subr.mxu0 0.0
    %369 = vmatpush1.msra.mxu0 0.0
    %370 = vmatprep.subr.mxu0 0.0
    %371 = vmatpush1.msra.mxu0 0.0
    %372 = vmatprep.subr.mxu0 0.0
    %373 = vmatpush1.msra.mxu0 0.0
    %374 = vmatprep.subr.mxu0 0.0
    %375 = vmatpush1.msra.mxu0 0.0
    %376 = vmatprep.subr.mxu0 0.0
    %377 = vmatpush1.msra.mxu0 0.0
    %378 = vmatprep.subr.mxu0 0.0
    %379 = vmatpush1.msra.mxu0 0.0
    %380 = vmatprep.subr.mxu0 0.0
    %381 = vmatpush1.msra.mxu0 0.0
    %382 = vmatprep.subr.mxu0 0.0
    %383 = vmatpush1.msra.mxu0 0.0
    %384 = vmatprep.subr.mxu0 0.0
    %385 = vmatpush1.msra.mxu0 0.0
    %386 = vmatprep.subr.mxu0 0.0
    %387 = vmatpush1.msra.mxu0 0.0
    %388 = vmatprep.subr.mxu0 0.0
    %389 = vmatpush1.msra.mxu0 0.0
    %390 = vmatprep.subr.mxu0 0.0
    %391 = vmatpush1.msra.mxu0 0.0
    %392 = vmatprep.subr.mxu0 0.0
    %393 = vmatpush1.msra.mxu0 0.0
    %394 = vmatprep.subr.mxu0 0.0
    %395 = vmatpush1.msra.mxu0 0.0
    %396 = vmatprep.subr.mxu0 0.0
    %397 = vmatpush1.msra.mxu0 0.0
    %398 = vmatprep.subr.mxu0 0.0
    %399 = vmatpush1.msra.mxu0 0.0
    %400 = vmatprep.subr.mxu0 0.0
    %401 = vmatpush1.msra.mxu0 0.0
    %402 = vmatprep.subr.mxu0 0.0
    %403 = vmatpush1.msra.mxu0 0.0
    %404 = vmatprep.subr.mxu0 0.0
    %405 = vmatpush1.msra.mxu0 0.0
    %406 = vmatprep.mubr.f32.mxu0 0.0
    %407 = vmatmul.mubr.f32.gmra.mrb[0].mxu0 %v340
    %v408 = vpop.f32.mrb[0].mxu0
    %v409 = vadd.f32 0.0, %v408
    %v410 = vpop.f32.mrb[0].mxu0
    %411 = vdwg.mxu0
    %v412 = vadd.f32 %v201, %v409
    %v413 = vxor.u32 %v412, 2147483648
    %v414 = vmul.f32 %v413, 1.442695
    %v415 = vpow.pop %v414
    %v416 = vadd.f32 %v415, 1.0
    %v417 = vrcp.pop %v416
    %v418 = vmul.f32 1.0, %v417
    %v419 = vtanh.pop %v412
    %v420 = vmul.f32 %v418, %v330
    %422 = vrot.lane.b32.xlu0 %v419, 64
    %v423 = vpop.permute.xlu0 %422
    %v425 = vmul.f32 %v418, %v423
    %427 = vrot.lane.b32.xlu0 %v425, 32
    %v428 = vpop.permute.xlu0 %427
    %v430 = vadd.f32 %v420, %v428
    %v431 = vtanh.pop %v430
    %433 = vrot.lane.b32.xlu0 %v431, 64
    %v434 = vpop.permute.xlu0 %433
    %v436 = vmul.f32 %v418, %v434
    %438 = vrot.lane.b32.xlu0 %v436, 32
    %v439 = vpop.permute.xlu0 %438
    %v440 = vsel %vm238, %v439, 0
    %442 = vmatprep.subr.mxu0 0.0
    %443 = vmatpush1.msra.mxu0 %v234
    %444 = vmatprep.subr.mxu0 0.0
    %445 = vmatpush1.msra.mxu0 %v235
    %446 = vmatprep.subr.mxu0 0.0
    %447 = vmatpush1.msra.mxu0 %v236
    %448 = vmatprep.subr.mxu0 0.0
    %449 = vmatpush1.msra.mxu0 %v237
    %450 = vmatprep.subr.mxu0 0.0
    %451 = vmatpush1.msra.mxu0 0.0
    %452 = vmatprep.subr.mxu0 0.0
    %453 = vmatpush1.msra.mxu0 0.0
    %454 = vmatprep.subr.mxu0 0.0
    %455 = vmatpush1.msra.mxu0 0.0
    %456 = vmatprep.subr.mxu0 0.0
    %457 = vmatpush1.msra.mxu0 0.0
    %458 = vmatprep.subr.mxu0 0.0
    %459 = vmatpush1.msra.mxu0 0.0
    %460 = vmatprep.subr.mxu0 0.0
    %461 = vmatpush1.msra.mxu0 0.0
    %462 = vmatprep.subr.mxu0 0.0
    %463 = vmatpush1.msra.mxu0 0.0
    %464 = vmatprep.subr.mxu0 0.0
    %465 = vmatpush1.msra.mxu0 0.0
    %466 = vmatprep.subr.mxu0 0.0
    %467 = vmatpush1.msra.mxu0 0.0
    %468 = vmatprep.subr.mxu0 0.0
    %469 = vmatpush1.msra.mxu0 0.0
    %470 = vmatprep.subr.mxu0 0.0
    %471 = vmatpush1.msra.mxu0 0.0
    %472 = vmatprep.subr.mxu0 0.0
    %473 = vmatpush1.msra.mxu0 0.0
    %474 = vmatprep.subr.mxu0 0.0
    %475 = vmatpush1.msra.mxu0 0.0
    %476 = vmatprep.subr.mxu0 0.0
    %477 = vmatpush1.msra.mxu0 0.0
    %478 = vmatprep.subr.mxu0 0.0
    %479 = vmatpush1.msra.mxu0 0.0
    %480 = vmatprep.subr.mxu0 0.0
    %481 = vmatpush1.msra.mxu0 0.0
    %482 = vmatprep.subr.mxu0 0.0
    %483 = vmatpush1.msra.mxu0 0.0
    %484 = vmatprep.subr.mxu0 0.0
    %485 = vmatpush1.msra.mxu0 0.0
    %486 = vmatprep.subr.mxu0 0.0
    %487 = vmatpush1.msra.mxu0 0.0
    %488 = vmatprep.subr.mxu0 0.0
    %489 = vmatpush1.msra.mxu0 0.0
    %490 = vmatprep.subr.mxu0 0.0
    %491 = vmatpush1.msra.mxu0 0.0
    %492 = vmatprep.subr.mxu0 0.0
    %493 = vmatpush1.msra.mxu0 0.0
    %494 = vmatprep.subr.mxu0 0.0
    %495 = vmatpush1.msra.mxu0 0.0
    %496 = vmatprep.subr.mxu0 0.0
    %497 = vmatpush1.msra.mxu0 0.0
    %498 = vmatprep.subr.mxu0 0.0
    %499 = vmatpush1.msra.mxu0 0.0
    %500 = vmatprep.subr.mxu0 0.0
    %501 = vmatpush1.msra.mxu0 0.0
    %502 = vmatprep.subr.mxu0 0.0
    %503 = vmatpush1.msra.mxu0 0.0
    %504 = vmatprep.subr.mxu0 0.0
    %505 = vmatpush1.msra.mxu0 0.0
    %506 = vmatprep.mubr.f32.mxu0 0.0
    %507 = vmatmul.mubr.f32.gmra.mrb[0].mxu0 %v440
    %v508 = vpop.f32.mrb[0].mxu0
    %v509 = vadd.f32 0.0, %v508
    %v510 = vpop.f32.mrb[0].mxu0
    %511 = vdwg.mxu0
    %v512 = vadd.f32 %v206, %v509
    %v513 = vxor.u32 %v512, 2147483648
    %v514 = vmul.f32 %v513, 1.442695
    %v515 = vpow.pop %v514
    %v516 = vadd.f32 %v515, 1.0
    %v517 = vrcp.pop %v516
    %v518 = vmul.f32 1.0, %v517
    %v519 = vtanh.pop %v512
    %v520 = vmul.f32 %v518, %v430
    %522 = vrot.lane.b32.xlu0 %v519, 64
    %v523 = vpop.permute.xlu0 %522
    %v525 = vmul.f32 %v518, %v523
    %527 = vrot.lane.b32.xlu0 %v525, 32
    %v528 = vpop.permute.xlu0 %527
    %v530 = vadd.f32 %v520, %v528
    %v531 = vtanh.pop %v530
    %533 = vrot.lane.b32.xlu0 %v531, 64
    %v534 = vpop.permute.xlu0 %533
    %v536 = vmul.f32 %v518, %v534
    %538 = vrot.lane.b32.xlu0 %v536, 32
    %v539 = vpop.permute.xlu0 %538
    %v540 = vsel %vm238, %v539, 0
    %542 = vmatprep.subr.mxu0 0.0
    %543 = vmatpush1.msra.mxu0 %v234
    %544 = vmatprep.subr.mxu0 0.0
    %545 = vmatpush1.msra.mxu0 %v235
    %546 = vmatprep.subr.mxu0 0.0
    %547 = vmatpush1.msra.mxu0 %v236
    %548 = vmatprep.subr.mxu0 0.0
    %549 = vmatpush1.msra.mxu0 %v237
    %550 = vmatprep.subr.mxu0 0.0
    %551 = vmatpush1.msra.mxu0 0.0
    %552 = vmatprep.subr.mxu0 0.0
    %553 = vmatpush1.msra.mxu0 0.0
    %554 = vmatprep.subr.mxu0 0.0
    %555 = vmatpush1.msra.mxu0 0.0
    %556 = vmatprep.subr.mxu0 0.0
    %557 = vmatpush1.msra.mxu0 0.0
    %558 = vmatprep.subr.mxu0 0.0
    %559 = vmatpush1.msra.mxu0 0.0
    %560 = vmatprep.subr.mxu0 0.0
    %561 = vmatpush1.msra.mxu0 0.0
    %562 = vmatprep.subr.mxu0 0.0
    %563 = vmatpush1.msra.mxu0 0.0
    %564 = vmatprep.subr.mxu0 0.0
    %565 = vmatpush1.msra.mxu0 0.0
    %566 = vmatprep.subr.mxu0 0.0
    %567 = vmatpush1.msra.mxu0 0.0
    %568 = vmatprep.subr.mxu0 0.0
    %569 = vmatpush1.msra.mxu0 0.0
    %570 = vmatprep.subr.mxu0 0.0
    %571 = vmatpush1.msra.mxu0 0.0
    %572 = vmatprep.subr.mxu0 0.0
    %573 = vmatpush1.msra.mxu0 0.0
    %574 = vmatprep.subr.mxu0 0.0
    %575 = vmatpush1.msra.mxu0 0.0
    %576 = vmatprep.subr.mxu0 0.0
    %577 = vmatpush1.msra.mxu0 0.0
    %578 = vmatprep.subr.mxu0 0.0
    %579 = vmatpush1.msra.mxu0 0.0
    %580 = vmatprep.subr.mxu0 0.0
    %581 = vmatpush1.msra.mxu0 0.0
    %582 = vmatprep.subr.mxu0 0.0
    %583 = vmatpush1.msra.mxu0 0.0
    %584 = vmatprep.subr.mxu0 0.0
    %585 = vmatpush1.msra.mxu0 0.0
    %586 = vmatprep.subr.mxu0 0.0
    %587 = vmatpush1.msra.mxu0 0.0
    %588 = vmatprep.subr.mxu0 0.0
    %589 = vmatpush1.msra.mxu0 0.0
    %590 = vmatprep.subr.mxu0 0.0
    %591 = vmatpush1.msra.mxu0 0.0
    %592 = vmatprep.subr.mxu0 0.0
    %593 = vmatpush1.msra.mxu0 0.0
    %594 = vmatprep.subr.mxu0 0.0
    %595 = vmatpush1.msra.mxu0 0.0
    %596 = vmatprep.subr.mxu0 0.0
    %597 = vmatpush1.msra.mxu0 0.0
    %598 = vmatprep.subr.mxu0 0.0
    %599 = vmatpush1.msra.mxu0 0.0
    %600 = vmatprep.subr.mxu0 0.0
    %601 = vmatpush1.msra.mxu0 0.0
    %602 = vmatprep.subr.mxu0 0.0
    %603 = vmatpush1.msra.mxu0 0.0
    %604 = vmatprep.subr.mxu0 0.0
    %605 = vmatpush1.msra.mxu0 0.0
    %606 = vmatprep.mubr.f32.mxu0 0.0
    %607 = vmatmul.mubr.f32.gmra.mrb[0].mxu0 %v540
    %v608 = vpop.f32.mrb[0].mxu0
    %v609 = vadd.f32 0.0, %v608
    %v610 = vpop.f32.mrb[0].mxu0
    %611 = vdwg.mxu0
    %v612 = vadd.f32 %v211, %v609
    %v613 = vxor.u32 %v612, 2147483648
    %v614 = vmul.f32 %v613, 1.442695
    %v615 = vpow.pop %v614
    %v616 = vadd.f32 %v615, 1.0
    %v617 = vrcp.pop %v616
    %v618 = vmul.f32 1.0, %v617
    %v619 = vtanh.pop %v612
    %v620 = vmul.f32 %v618, %v530
    %622 = vrot.lane.b32.xlu0 %v619, 64
    %v623 = vpop.permute.xlu0 %622
    %v625 = vmul.f32 %v618, %v623
    %627 = vrot.lane.b32.xlu0 %v625, 32
    %v628 = vpop.permute.xlu0 %627
    %v630 = vadd.f32 %v620, %v628
    %v631 = vtanh.pop %v630
    %633 = vrot.lane.b32.xlu0 %v631, 64
    %v634 = vpop.permute.xlu0 %633
    %v636 = vmul.f32 %v618, %v634
    %638 = vrot.lane.b32.xlu0 %v636, 32
    %v639 = vpop.permute.xlu0 %638
    %v640 = vsel %vm238, %v639, 0
    %642 = vmatprep.subr.mxu0 0.0
    %643 = vmatpush1.msra.mxu0 %v234
    %644 = vmatprep.subr.mxu0 0.0
    %645 = vmatpush1.msra.mxu0 %v235
    %646 = vmatprep.subr.mxu0 0.0
    %647 = vmatpush1.msra.mxu0 %v236
    %648 = vmatprep.subr.mxu0 0.0
    %649 = vmatpush1.msra.mxu0 %v237
    %650 = vmatprep.subr.mxu0 0.0
    %651 = vmatpush1.msra.mxu0 0.0
    %652 = vmatprep.subr.mxu0 0.0
    %653 = vmatpush1.msra.mxu0 0.0
    %654 = vmatprep.subr.mxu0 0.0
    %655 = vmatpush1.msra.mxu0 0.0
    %656 = vmatprep.subr.mxu0 0.0
    %657 = vmatpush1.msra.mxu0 0.0
    %658 = vmatprep.subr.mxu0 0.0
    %659 = vmatpush1.msra.mxu0 0.0
    %660 = vmatprep.subr.mxu0 0.0
    %661 = vmatpush1.msra.mxu0 0.0
    %662 = vmatprep.subr.mxu0 0.0
    %663 = vmatpush1.msra.mxu0 0.0
    %664 = vmatprep.subr.mxu0 0.0
    %665 = vmatpush1.msra.mxu0 0.0
    %666 = vmatprep.subr.mxu0 0.0
    %667 = vmatpush1.msra.mxu0 0.0
    %668 = vmatprep.subr.mxu0 0.0
    %669 = vmatpush1.msra.mxu0 0.0
    %670 = vmatprep.subr.mxu0 0.0
    %671 = vmatpush1.msra.mxu0 0.0
    %672 = vmatprep.subr.mxu0 0.0
    %673 = vmatpush1.msra.mxu0 0.0
    %674 = vmatprep.subr.mxu0 0.0
    %675 = vmatpush1.msra.mxu0 0.0
    %676 = vmatprep.subr.mxu0 0.0
    %677 = vmatpush1.msra.mxu0 0.0
    %678 = vmatprep.subr.mxu0 0.0
    %679 = vmatpush1.msra.mxu0 0.0
    %680 = vmatprep.subr.mxu0 0.0
    %681 = vmatpush1.msra.mxu0 0.0
    %682 = vmatprep.subr.mxu0 0.0
    %683 = vmatpush1.msra.mxu0 0.0
    %684 = vmatprep.subr.mxu0 0.0
    %685 = vmatpush1.msra.mxu0 0.0
    %686 = vmatprep.subr.mxu0 0.0
    %687 = vmatpush1.msra.mxu0 0.0
    %688 = vmatprep.subr.mxu0 0.0
    %689 = vmatpush1.msra.mxu0 0.0
    %690 = vmatprep.subr.mxu0 0.0
    %691 = vmatpush1.msra.mxu0 0.0
    %692 = vmatprep.subr.mxu0 0.0
    %693 = vmatpush1.msra.mxu0 0.0
    %694 = vmatprep.subr.mxu0 0.0
    %695 = vmatpush1.msra.mxu0 0.0
    %696 = vmatprep.subr.mxu0 0.0
    %697 = vmatpush1.msra.mxu0 0.0
    %698 = vmatprep.subr.mxu0 0.0
    %699 = vmatpush1.msra.mxu0 0.0
    %700 = vmatprep.subr.mxu0 0.0
    %701 = vmatpush1.msra.mxu0 0.0
    %702 = vmatprep.subr.mxu0 0.0
    %703 = vmatpush1.msra.mxu0 0.0
    %704 = vmatprep.subr.mxu0 0.0
    %705 = vmatpush1.msra.mxu0 0.0
    %706 = vmatprep.mubr.f32.mxu0 0.0
    %707 = vmatmul.mubr.f32.gmra.mrb[0].mxu0 %v640
    %v708 = vpop.f32.mrb[0].mxu0
    %v709 = vadd.f32 0.0, %v708
    %v710 = vpop.f32.mrb[0].mxu0
    %711 = vdwg.mxu0
    %v712 = vadd.f32 %v216, %v709
    %v713 = vxor.u32 %v712, 2147483648
    %v714 = vmul.f32 %v713, 1.442695
    %v715 = vpow.pop %v714
    %v716 = vadd.f32 %v715, 1.0
    %v717 = vrcp.pop %v716
    %v718 = vmul.f32 1.0, %v717
    %v719 = vtanh.pop %v712
    %v720 = vmul.f32 %v718, %v630
    %722 = vrot.lane.b32.xlu0 %v719, 64
    %v723 = vpop.permute.xlu0 %722
    %v725 = vmul.f32 %v718, %v723
    %727 = vrot.lane.b32.xlu0 %v725, 32
    %v728 = vpop.permute.xlu0 %727
    %v730 = vadd.f32 %v720, %v728
    %v731 = vtanh.pop %v730
    %733 = vrot.lane.b32.xlu0 %v731, 64
    %v734 = vpop.permute.xlu0 %733
    %v736 = vmul.f32 %v718, %v734
    %738 = vrot.lane.b32.xlu0 %v736, 32
    %v739 = vpop.permute.xlu0 %738
    %v740 = vsel %vm238, %v739, 0
    %742 = vmatprep.subr.mxu0 0.0
    %743 = vmatpush1.msra.mxu0 %v234
    %744 = vmatprep.subr.mxu0 0.0
    %745 = vmatpush1.msra.mxu0 %v235
    %746 = vmatprep.subr.mxu0 0.0
    %747 = vmatpush1.msra.mxu0 %v236
    %748 = vmatprep.subr.mxu0 0.0
    %749 = vmatpush1.msra.mxu0 %v237
    %750 = vmatprep.subr.mxu0 0.0
    %751 = vmatpush1.msra.mxu0 0.0
    %752 = vmatprep.subr.mxu0 0.0
    %753 = vmatpush1.msra.mxu0 0.0
    %754 = vmatprep.subr.mxu0 0.0
    %755 = vmatpush1.msra.mxu0 0.0
    %756 = vmatprep.subr.mxu0 0.0
    %757 = vmatpush1.msra.mxu0 0.0
    %758 = vmatprep.subr.mxu0 0.0
    %759 = vmatpush1.msra.mxu0 0.0
    %760 = vmatprep.subr.mxu0 0.0
    %761 = vmatpush1.msra.mxu0 0.0
    %762 = vmatprep.subr.mxu0 0.0
    %763 = vmatpush1.msra.mxu0 0.0
    %764 = vmatprep.subr.mxu0 0.0
    %765 = vmatpush1.msra.mxu0 0.0
    %766 = vmatprep.subr.mxu0 0.0
    %767 = vmatpush1.msra.mxu0 0.0
    %768 = vmatprep.subr.mxu0 0.0
    %769 = vmatpush1.msra.mxu0 0.0
    %770 = vmatprep.subr.mxu0 0.0
    %771 = vmatpush1.msra.mxu0 0.0
    %772 = vmatprep.subr.mxu0 0.0
    %773 = vmatpush1.msra.mxu0 0.0
    %774 = vmatprep.subr.mxu0 0.0
    %775 = vmatpush1.msra.mxu0 0.0
    %776 = vmatprep.subr.mxu0 0.0
    %777 = vmatpush1.msra.mxu0 0.0
    %778 = vmatprep.subr.mxu0 0.0
    %779 = vmatpush1.msra.mxu0 0.0
    %780 = vmatprep.subr.mxu0 0.0
    %781 = vmatpush1.msra.mxu0 0.0
    %782 = vmatprep.subr.mxu0 0.0
    %783 = vmatpush1.msra.mxu0 0.0
    %784 = vmatprep.subr.mxu0 0.0
    %785 = vmatpush1.msra.mxu0 0.0
    %786 = vmatprep.subr.mxu0 0.0
    %787 = vmatpush1.msra.mxu0 0.0
    %788 = vmatprep.subr.mxu0 0.0
    %789 = vmatpush1.msra.mxu0 0.0
    %790 = vmatprep.subr.mxu0 0.0
    %791 = vmatpush1.msra.mxu0 0.0
    %792 = vmatprep.subr.mxu0 0.0
    %793 = vmatpush1.msra.mxu0 0.0
    %794 = vmatprep.subr.mxu0 0.0
    %795 = vmatpush1.msra.mxu0 0.0
    %796 = vmatprep.subr.mxu0 0.0
    %797 = vmatpush1.msra.mxu0 0.0
    %798 = vmatprep.subr.mxu0 0.0
    %799 = vmatpush1.msra.mxu0 0.0
    %800 = vmatprep.subr.mxu0 0.0
    %801 = vmatpush1.msra.mxu0 0.0
    %802 = vmatprep.subr.mxu0 0.0
    %803 = vmatpush1.msra.mxu0 0.0
    %804 = vmatprep.subr.mxu0 0.0
    %805 = vmatpush1.msra.mxu0 0.0
    %806 = vmatprep.mubr.f32.mxu0 0.0
    %807 = vmatmul.mubr.f32.gmra.mrb[0].mxu0 %v740
    %v808 = vpop.f32.mrb[0].mxu0
    %v809 = vadd.f32 0.0, %v808
    %v810 = vpop.f32.mrb[0].mxu0
    %811 = vdwg.mxu0
    %v812 = vadd.f32 %v221, %v809
    %v813 = vxor.u32 %v812, 2147483648
    %v814 = vmul.f32 %v813, 1.442695
    %v815 = vpow.pop %v814
    %v816 = vadd.f32 %v815, 1.0
    %v817 = vrcp.pop %v816
    %v818 = vmul.f32 1.0, %v817
    %v819 = vtanh.pop %v812
    %v820 = vmul.f32 %v818, %v730
    %822 = vrot.lane.b32.xlu0 %v819, 64
    %v823 = vpop.permute.xlu0 %822
    %v825 = vmul.f32 %v818, %v823
    %827 = vrot.lane.b32.xlu0 %v825, 32
    %v828 = vpop.permute.xlu0 %827
    %v830 = vadd.f32 %v820, %v828
    %v831 = vtanh.pop %v830
    %833 = vrot.lane.b32.xlu0 %v831, 64
    %v834 = vpop.permute.xlu0 %833
    %v836 = vmul.f32 %v818, %v834
    %838 = vrot.lane.b32.xlu0 %v836, 32
    %v839 = vpop.permute.xlu0 %838
    %v840 = vsel %vm238, %v839, 0
    %842 = vmatprep.subr.mxu0 0.0
    %843 = vmatpush1.msra.mxu0 %v234
    %844 = vmatprep.subr.mxu0 0.0
    %845 = vmatpush1.msra.mxu0 %v235
    %846 = vmatprep.subr.mxu0 0.0
    %847 = vmatpush1.msra.mxu0 %v236
    %848 = vmatprep.subr.mxu0 0.0
    %849 = vmatpush1.msra.mxu0 %v237
    %850 = vmatprep.subr.mxu0 0.0
    %851 = vmatpush1.msra.mxu0 0.0
    %852 = vmatprep.subr.mxu0 0.0
    %853 = vmatpush1.msra.mxu0 0.0
    %854 = vmatprep.subr.mxu0 0.0
    %855 = vmatpush1.msra.mxu0 0.0
    %856 = vmatprep.subr.mxu0 0.0
    %857 = vmatpush1.msra.mxu0 0.0
    %858 = vmatprep.subr.mxu0 0.0
    %859 = vmatpush1.msra.mxu0 0.0
    %860 = vmatprep.subr.mxu0 0.0
    %861 = vmatpush1.msra.mxu0 0.0
    %862 = vmatprep.subr.mxu0 0.0
    %863 = vmatpush1.msra.mxu0 0.0
    %864 = vmatprep.subr.mxu0 0.0
    %865 = vmatpush1.msra.mxu0 0.0
    %866 = vmatprep.subr.mxu0 0.0
    %867 = vmatpush1.msra.mxu0 0.0
    %868 = vmatprep.subr.mxu0 0.0
    %869 = vmatpush1.msra.mxu0 0.0
    %870 = vmatprep.subr.mxu0 0.0
    %871 = vmatpush1.msra.mxu0 0.0
    %872 = vmatprep.subr.mxu0 0.0
    %873 = vmatpush1.msra.mxu0 0.0
    %874 = vmatprep.subr.mxu0 0.0
    %875 = vmatpush1.msra.mxu0 0.0
    %876 = vmatprep.subr.mxu0 0.0
    %877 = vmatpush1.msra.mxu0 0.0
    %878 = vmatprep.subr.mxu0 0.0
    %879 = vmatpush1.msra.mxu0 0.0
    %880 = vmatprep.subr.mxu0 0.0
    %881 = vmatpush1.msra.mxu0 0.0
    %882 = vmatprep.subr.mxu0 0.0
    %883 = vmatpush1.msra.mxu0 0.0
    %884 = vmatprep.subr.mxu0 0.0
    %885 = vmatpush1.msra.mxu0 0.0
    %886 = vmatprep.subr.mxu0 0.0
    %887 = vmatpush1.msra.mxu0 0.0
    %888 = vmatprep.subr.mxu0 0.0
    %889 = vmatpush1.msra.mxu0 0.0
    %890 = vmatprep.subr.mxu0 0.0
    %891 = vmatpush1.msra.mxu0 0.0
    %892 = vmatprep.subr.mxu0 0.0
    %893 = vmatpush1.msra.mxu0 0.0
    %894 = vmatprep.subr.mxu0 0.0
    %895 = vmatpush1.msra.mxu0 0.0
    %896 = vmatprep.subr.mxu0 0.0
    %897 = vmatpush1.msra.mxu0 0.0
    %898 = vmatprep.subr.mxu0 0.0
    %899 = vmatpush1.msra.mxu0 0.0
    %900 = vmatprep.subr.mxu0 0.0
    %901 = vmatpush1.msra.mxu0 0.0
    %902 = vmatprep.subr.mxu0 0.0
    %903 = vmatpush1.msra.mxu0 0.0
    %904 = vmatprep.subr.mxu0 0.0
    %905 = vmatpush1.msra.mxu0 0.0
    %906 = vmatprep.mubr.f32.mxu0 0.0
    %907 = vmatmul.mubr.f32.gmra.mrb[0].mxu0 %v840
    %v908 = vpop.f32.mrb[0].mxu0
    %v909 = vadd.f32 0.0, %v908
    %v910 = vpop.f32.mrb[0].mxu0
    %911 = vdwg.mxu0
    %v912 = vadd.f32 %v226, %v909
    %v913 = vxor.u32 %v912, 2147483648
    %v914 = vmul.f32 %v913, 1.442695
    %v915 = vpow.pop %v914
    %v916 = vadd.f32 %v915, 1.0
    %v917 = vrcp.pop %v916
    %v918 = vmul.f32 1.0, %v917
    %v919 = vtanh.pop %v912
    %v920 = vmul.f32 %v918, %v830
    %922 = vrot.lane.b32.xlu0 %v919, 64
    %v923 = vpop.permute.xlu0 %922
    %v925 = vmul.f32 %v918, %v923
    %927 = vrot.lane.b32.xlu0 %v925, 32
    %v928 = vpop.permute.xlu0 %927
    %v930 = vadd.f32 %v920, %v928
    %v931 = vtanh.pop %v930
    %933 = vrot.lane.b32.xlu0 %v931, 64
    %v934 = vpop.permute.xlu0 %933
    %v936 = vmul.f32 %v918, %v934
    %938 = vrot.lane.b32.xlu0 %v936, 32
    %v939 = vpop.permute.xlu0 %938
    %v940 = vsel %vm238, %v939, 0
    %942 = vmatprep.subr.mxu0 0.0
    %943 = vmatpush1.msra.mxu0 %v234
    %944 = vmatprep.subr.mxu0 0.0
    %945 = vmatpush1.msra.mxu0 %v235
    %946 = vmatprep.subr.mxu0 0.0
    %947 = vmatpush1.msra.mxu0 %v236
    %948 = vmatprep.subr.mxu0 0.0
    %949 = vmatpush1.msra.mxu0 %v237
    %950 = vmatprep.subr.mxu0 0.0
    %951 = vmatpush1.msra.mxu0 0.0
    %952 = vmatprep.subr.mxu0 0.0
    %953 = vmatpush1.msra.mxu0 0.0
    %954 = vmatprep.subr.mxu0 0.0
    %955 = vmatpush1.msra.mxu0 0.0
    %956 = vmatprep.subr.mxu0 0.0
    %957 = vmatpush1.msra.mxu0 0.0
    %958 = vmatprep.subr.mxu0 0.0
    %959 = vmatpush1.msra.mxu0 0.0
    %960 = vmatprep.subr.mxu0 0.0
    %961 = vmatpush1.msra.mxu0 0.0
    %962 = vmatprep.subr.mxu0 0.0
    %963 = vmatpush1.msra.mxu0 0.0
    %964 = vmatprep.subr.mxu0 0.0
    %965 = vmatpush1.msra.mxu0 0.0
    %966 = vmatprep.subr.mxu0 0.0
    %967 = vmatpush1.msra.mxu0 0.0
    %968 = vmatprep.subr.mxu0 0.0
    %969 = vmatpush1.msra.mxu0 0.0
    %970 = vmatprep.subr.mxu0 0.0
    %971 = vmatpush1.msra.mxu0 0.0
    %972 = vmatprep.subr.mxu0 0.0
    %973 = vmatpush1.msra.mxu0 0.0
    %974 = vmatprep.subr.mxu0 0.0
    %975 = vmatpush1.msra.mxu0 0.0
    %976 = vmatprep.subr.mxu0 0.0
    %977 = vmatpush1.msra.mxu0 0.0
    %978 = vmatprep.subr.mxu0 0.0
    %979 = vmatpush1.msra.mxu0 0.0
    %980 = vmatprep.subr.mxu0 0.0
    %981 = vmatpush1.msra.mxu0 0.0
    %982 = vmatprep.subr.mxu0 0.0
    %983 = vmatpush1.msra.mxu0 0.0
    %984 = vmatprep.subr.mxu0 0.0
    %985 = vmatpush1.msra.mxu0 0.0
    %986 = vmatprep.subr.mxu0 0.0
    %987 = vmatpush1.msra.mxu0 0.0
    %988 = vmatprep.subr.mxu0 0.0
    %989 = vmatpush1.msra.mxu0 0.0
    %990 = vmatprep.subr.mxu0 0.0
    %991 = vmatpush1.msra.mxu0 0.0
    %992 = vmatprep.subr.mxu0 0.0
    %993 = vmatpush1.msra.mxu0 0.0
    %994 = vmatprep.subr.mxu0 0.0
    %995 = vmatpush1.msra.mxu0 0.0
    %996 = vmatprep.subr.mxu0 0.0
    %997 = vmatpush1.msra.mxu0 0.0
    %998 = vmatprep.subr.mxu0 0.0
    %999 = vmatpush1.msra.mxu0 0.0
    %1000 = vmatprep.subr.mxu0 0.0
    %1001 = vmatpush1.msra.mxu0 0.0
    %1002 = vmatprep.subr.mxu0 0.0
    %1003 = vmatpush1.msra.mxu0 0.0
    %1004 = vmatprep.subr.mxu0 0.0
    %1005 = vmatpush1.msra.mxu0 0.0
    %1006 = vmatprep.mubr.f32.mxu0 0.0
    %1007 = vmatmul.mubr.f32.gmra.mrb[0].mxu0 %v940
    %v1008 = vpop.f32.mrb[0].mxu0
    %v1009 = vadd.f32 0.0, %v1008
    %v1010 = vpop.f32.mrb[0].mxu0
    %1011 = vdwg.mxu0
    %v1012 = vadd.f32 %v231, %v1009
    %v1013 = vxor.u32 %v1012, 2147483648
    %v1014 = vmul.f32 %v1013, 1.442695
    %v1015 = vpow.pop %v1014
    %v1016 = vadd.f32 %v1015, 1.0
    %v1017 = vrcp.pop %v1016
    %v1018 = vmul.f32 1.0, %v1017
    %v1019 = vtanh.pop %v1012
    %v1020 = vmul.f32 %v1018, %v930
    %1022 = vrot.lane.b32.xlu0 %v1019, 64
    %v1023 = vpop.permute.xlu0 %1022
    %v1025 = vmul.f32 %v1018, %v1023
    %1027 = vrot.lane.b32.xlu0 %v1025, 32
    %v1028 = vpop.permute.xlu0 %1027
    %v1030 = vadd.f32 %v1020, %v1028
    %v1031 = vtanh.pop %v1030
    %1033 = vrot.lane.b32.xlu0 %v1031, 64
    %v1034 = vpop.permute.xlu0 %1033
    %v1036 = vmul.f32 %v1018, %v1034
    %v1037 = vld [vmem:[#allocation2] sm:$0xff]
    %v1038 = vld [vmem:[#allocation2 + $0x8] sm:$0xff]
    %v1039 = vld [vmem:[#allocation2 + $0x10] sm:$0xff]
    %v1040 = vld [vmem:[#allocation2 + $0x18] sm:$0xff]
    %v1041 = vld [vmem:[%s4] sm:$0x1]
    %v1043 = vlaneseq
    %v1044 = vshrl.u32 %v1043, 7
    %v1045 = vsub.s32 0, %v1044
    %v1046 = vrot.slane %v1041, %v1045
    %1049 = vrot.lane.b32.xlu0 %v1036, 32
    %v1050 = vpop.permute.xlu0 %1049
    %v1051 = vsel %vm238, %v1050, 0
    %1053 = vmatprep.subr.mxu0 0.0
    %1054 = vmatpush1.msra.mxu0 %v1037
    %1055 = vmatprep.subr.mxu0 0.0
    %1056 = vmatpush1.msra.mxu0 %v1038
    %1057 = vmatprep.subr.mxu0 0.0
    %1058 = vmatpush1.msra.mxu0 %v1039
    %1059 = vmatprep.subr.mxu0 0.0
    %1060 = vmatpush1.msra.mxu0 %v1040
    %1061 = vmatprep.subr.mxu0 0.0
    %1062 = vmatpush1.msra.mxu0 0.0
    %1063 = vmatprep.subr.mxu0 0.0
    %1064 = vmatpush1.msra.mxu0 0.0
    %1065 = vmatprep.subr.mxu0 0.0
    %1066 = vmatpush1.msra.mxu0 0.0
    %1067 = vmatprep.subr.mxu0 0.0
    %1068 = vmatpush1.msra.mxu0 0.0
    %1069 = vmatprep.subr.mxu0 0.0
    %1070 = vmatpush1.msra.mxu0 0.0
    %1071 = vmatprep.subr.mxu0 0.0
    %1072 = vmatpush1.msra.mxu0 0.0
    %1073 = vmatprep.subr.mxu0 0.0
    %1074 = vmatpush1.msra.mxu0 0.0
    %1075 = vmatprep.subr.mxu0 0.0
    %1076 = vmatpush1.msra.mxu0 0.0
    %1077 = vmatprep.subr.mxu0 0.0
    %1078 = vmatpush1.msra.mxu0 0.0
    %1079 = vmatprep.subr.mxu0 0.0
    %1080 = vmatpush1.msra.mxu0 0.0
    %1081 = vmatprep.subr.mxu0 0.0
    %1082 = vmatpush1.msra.mxu0 0.0
    %1083 = vmatprep.subr.mxu0 0.0
    %1084 = vmatpush1.msra.mxu0 0.0
    %1085 = vmatprep.subr.mxu0 0.0
    %1086 = vmatpush1.msra.mxu0 0.0
    %1087 = vmatprep.subr.mxu0 0.0
    %1088 = vmatpush1.msra.mxu0 0.0
    %1089 = vmatprep.subr.mxu0 0.0
    %1090 = vmatpush1.msra.mxu0 0.0
    %1091 = vmatprep.subr.mxu0 0.0
    %1092 = vmatpush1.msra.mxu0 0.0
    %1093 = vmatprep.subr.mxu0 0.0
    %1094 = vmatpush1.msra.mxu0 0.0
    %1095 = vmatprep.subr.mxu0 0.0
    %1096 = vmatpush1.msra.mxu0 0.0
    %1097 = vmatprep.subr.mxu0 0.0
    %1098 = vmatpush1.msra.mxu0 0.0
    %1099 = vmatprep.subr.mxu0 0.0
    %1100 = vmatpush1.msra.mxu0 0.0
    %1101 = vmatprep.subr.mxu0 0.0
    %1102 = vmatpush1.msra.mxu0 0.0
    %1103 = vmatprep.subr.mxu0 0.0
    %1104 = vmatpush1.msra.mxu0 0.0
    %1105 = vmatprep.subr.mxu0 0.0
    %1106 = vmatpush1.msra.mxu0 0.0
    %1107 = vmatprep.subr.mxu0 0.0
    %1108 = vmatpush1.msra.mxu0 0.0
    %1109 = vmatprep.subr.mxu0 0.0
    %1110 = vmatpush1.msra.mxu0 0.0
    %1111 = vmatprep.subr.mxu0 0.0
    %1112 = vmatpush1.msra.mxu0 0.0
    %1113 = vmatprep.subr.mxu0 0.0
    %1114 = vmatpush1.msra.mxu0 0.0
    %1115 = vmatprep.subr.mxu0 0.0
    %1116 = vmatpush1.msra.mxu0 0.0
    %1117 = vmatprep.mubr.f32.mxu0 0.0
    %1118 = vmatmul.mubr.f32.gmra.mrb[0].mxu0 %v1051
    %v1119 = vpop.f32.mrb[0].mxu0
    %v1120 = vadd.f32 %v1046, %v1119
    %v1121 = vpop.f32.mrb[0].mxu0
    %1122 = vdwg.mxu0
    %1123 = vst [vmem:[#allocation5] sm:$0xff] %v1120
    // Predicated region
    $region26: #{lstm_forward_padded.1} parent=1 // pred_check
      _
    $region27: #{lstm_forward_padded.1} parent=1 // pred_check_branch
      %1125 = sbr.rel (0) target = $region29
    $region28: #{lstm_forward_padded.1} parent=1 // pred_region
      %s1127 = ssub.s32 128, 128
      %1128 = vsyncadd [#allocation4], %s1127
      %s1130 = sshll.u32 [#allocation5], 4
      %s1131 = int_to_ptr.vmem [resolvable:$true] %s1130
      %1133 = dma.vmem_to_hbm [thread:$0]  %s1131, 128, %s5, [#allocation4]
    $region29: #{lstm_forward_padded.1} parent=1 // pred_fallthru
      _
    // Predicated region
    $region30: #{lstm_forward_padded.1} parent=1 // pred_check
      _
    $region31: #{lstm_forward_padded.1} parent=1 // pred_check_branch
      %1135 = sbr.rel (0) target = $region33
    $region32: #{lstm_forward_padded.1} parent=1 // pred_region
      %1136 = dma.done [#allocation4], 128
    $region33: #{lstm_forward_padded.1} parent=1 // pred_fallthru
      _
    %1137 = vsyncpa [#allocation3], 1
    %1138 = vsyncpa [#allocation4], 1

</llo_original>
